<compile_context>
chip_gen: v7x
topology: tpu7x:2x2x1
jax: 0.10.0
libtpu: 0.0.40
codegen_flags: <defaults>
</compile_context>

<pallas_src>
import functools

import numpy as np
import jax
import jax.numpy as jnp
from jax.experimental import pallas as pl
from jax.experimental.pallas import tpu as pltpu


def _round_up(a, b):
    return (a + b - 1) // b * b


def decoder_block_kernel(x_ref, mask_ref, w1_ref, b1_ref, w2s_ref, b2_ref, o_ref, *,
                         kernel_size, stride, append):
    cout_p = o_ref.shape[1]
    w = o_ref.shape[2]

    # --- Conv1d(chin, chin, 1) + ReLU over the whole folded block: one MXU call ---
    y = jnp.dot(w1_ref[...], x_ref[...], preferred_element_type=jnp.float32)
    y = jnp.maximum(y + b1_ref[...], 0.0)
    # Zero the segment-tail / block-tail padding columns so the circular tap shifts wrap in zeros.
    y = y * mask_ref[...]

    # --- ConvTranspose1d: all K taps fused into ONE MXU call -> (K*Cout_p, Wg) ---
    z = jnp.dot(w2s_ref[...], y.astype(w2s_ref.dtype), preferred_element_type=jnp.float32)

    # --- Phase-decomposed scatter: phase r = bias + sum of shifted taps with k % stride == r ---
    bias = jnp.broadcast_to(b2_ref[...], (cout_p, w)).astype(jnp.float32)   # hoisted out of r-loop
    for r in range(stride):
        acc = bias
        for k in range(r, kernel_size, stride):
            q = k // stride
            zk = z[k * cout_p:(k + 1) * cout_p, :]           # sublane-aligned (Cout_p, Wg) slice
            if q:
                # XLU lane rotation; wrapped-in columns are zeroed padding, so this is an
                # exact per-segment right-shift by q columns.
                zk = pltpu.roll(zk, shift=q, axis=1)
            acc = acc + zk
        if append:
            acc = jnp.maximum(acc, 0.0)
        o_ref[r] = acc.astype(o_ref.dtype)                   # lane-dense store (Wg % 128 == 0)


def decoder_block(x_ncl, w1, b1, w2, b2, *, stride, append,
                  batch_block=None, mxu_dtype=jnp.float32):
    """x_ncl: (N, Cin, L) float32 (PyTorch NCL layout). Returns (N, Cout, Lout)."""
    N, cin, L = x_ncl.shape
    cin2, cout, K = w2.shape
    assert cin == cin2 and stride >= 1 and K >= 1 and N >= 1
    Lout = (L - 1) * stride + K
    qmax = (K - 1) // stride
    Lseg = L + qmax                        # per-batch phase-slab width (== ceil(Lout / stride))

    cin_p = _round_up(cin, 8)              # f32 sublane tile
    cout_p = _round_up(cout, 8)

    # --- block sizing: VMEM-budgeted, lane-dense, >= 2 grid steps when N >= 2 (v7x 2 TCs) ---
    try:
        vmem_cap = pltpu.get_tpu_info().vmem_capacity_bytes
    except Exception:
        vmem_cap = 64 << 20                # conservative (v7x per-TC VMEM)
    budget = max(6 << 20, vmem_cap // 8)   # resident-bytes budget per grid step
    # f32 bytes held per lane column: double-buffered x/mask/out blocks + y/z/acc temporaries.
    bytes_per_col = 4 * (2 * cin_p + 2 + 2 * stride * cout_p + cin_p + K * cout_p + cout_p)
    bg_vmem = max(1, (budget // bytes_per_col) // max(Lseg, 1))
    bg_tc = -(-N // 2) if N > 1 else 1     # cap so the "parallel" grid has >= 2 steps
    bg = batch_block if batch_block is not None else max(1, min(N, bg_vmem, bg_tc))
    G = -(-N // bg)                        # number of grid steps
    n_pad = G * bg                         # batch padded to whole blocks (handles prime N)
    Wg = _round_up(bg * Lseg, 128)         # lane-dense block width
    Wtot = G * Wg

    # --- one-time parameter reshuffles (channel-padded, MXU-friendly) ---
    f32 = jnp.float32
    w1m = jnp.zeros((cin_p, cin_p), f32).at[:cin, :cin].set(w1[:, :, 0]).astype(mxu_dtype)
    b1c = jnp.zeros((cin_p, 1), f32).at[:cin, 0].set(b1)
    w2p = jnp.zeros((cin_p, cout_p, K), f32).at[:cin, :cout, :].set(w2)
    w2s = jnp.transpose(w2p, (2, 1, 0)).reshape(K * cout_p, cin_p).astype(mxu_dtype)
    b2c = jnp.zeros((cout_p, 1), f32).at[:cout, 0].set(b2)

    # --- fold batch onto the lane axis: (N, Cin, L) -> (Cin_p, G*Wg) with zero-padded segments ---
    xt = jnp.transpose(x_ncl, (1, 0, 2))                                   # (Cin, N, L)
    xt = jnp.pad(xt, ((0, cin_p - cin), (0, n_pad - N), (0, Lseg - L)))    # (Cin_p, n_pad, Lseg)
    xt = xt.reshape(cin_p, G, bg * Lseg)
    xt = jnp.pad(xt, ((0, 0), (0, 0), (0, Wg - bg * Lseg)))
    x_folded = xt.reshape(cin_p, Wtot).astype(mxu_dtype)

    # Valid-column mask (host-built constant): 1 where a real (batch < N, l < L) column lives.
    mask_np = np.zeros((1, Wtot), np.float32)
    for g in range(G):
        for b in range(bg):
            n = g * bg + b
            if n < N:
                s = g * Wg + b * Lseg
                mask_np[0, s:s + L] = 1.0
    mask = jnp.asarray(mask_np)

    param_bytes = 4 * (cin_p * cin_p + cin_p + K * cout_p * cin_p + cout_p)
    resident = Wg * bytes_per_col + param_bytes
    vmem_limit = int(min(48 << 20, max(16 << 20, 2 * resident)))

    kernel = functools.partial(decoder_block_kernel,
                               kernel_size=K, stride=stride, append=append)

    # TODO(synk): for very long L, add an L-axis grid dimension with a qmax-column halo per tile
    # instead of whole-L segments, so blocks keep fitting v7x's 64 MiB VMEM.
    phases = pl.pallas_call(
        kernel,
        out_shape=jax.ShapeDtypeStruct((stride, cout_p, Wtot), jnp.float32),
        grid_spec=pltpu.PrefetchScalarGridSpec(
            num_scalar_prefetch=0,
            grid=(G,),
            in_specs=[
                pl.BlockSpec((cin_p, Wg), lambda i: (0, i)),
                pl.BlockSpec((1, Wg), lambda i: (0, i)),
                pl.BlockSpec((cin_p, cin_p), lambda i: (0, 0)),
                pl.BlockSpec((cin_p, 1), lambda i: (0, 0)),
                pl.BlockSpec((K * cout_p, cin_p), lambda i: (0, 0)),
                pl.BlockSpec((cout_p, 1), lambda i: (0, 0)),
            ],
            out_specs=pl.BlockSpec((stride, cout_p, Wg), lambda i: (0, 0, i)),
        ),
        compiler_params=pltpu.CompilerParams(
            dimension_semantics=("parallel",),
            vmem_limit_bytes=vmem_limit),
    )(x_folded, mask, w1m, b1c, w2s, b2c)

    # Phase -> position interleave + padding removal (one small XLA transpose of the output).
    # TODO(synk): for stride>1 an in-kernel lane swizzle (roll+select) could emit the interleaved
    # (Cout, Lout) layout directly and drop this transpose.
    ph = phases.reshape(stride, cout_p, G, Wg)[:, :cout, :, :bg * Lseg]
    ph = ph.reshape(stride, cout, G * bg, Lseg)[:, :, :N, :]
    out = jnp.transpose(ph, (2, 1, 3, 0)).reshape(N, cout, Lseg * stride)
    return out[:, :, :Lout]


def ref_forward(x_ncl, w1, b1, w2, b2, *, stride, append):
    """Pure numpy reference matching PyTorch semantics (padding=0, dilation=1)."""
    x = np.asarray(x_ncl, np.float32)
    w1 = np.asarray(w1, np.float32)
    b1 = np.asarray(b1, np.float32)
    w2 = np.asarray(w2, np.float32)
    b2 = np.asarray(b2, np.float32)
    N, cin, L = x.shape
    y = np.einsum("ncl,dc->ndl", x, w1[:, :, 0]) + b1[None, :, None]
    y = np.maximum(y, 0.0)
    cin2, cout, K = w2.shape
    Lout = (L - 1) * stride + K
    out = np.zeros((N, cout, Lout), np.float32) + b2[None, :, None]
    for l in range(L):
        for k in range(K):
            out[:, :, l * stride + k] += np.einsum("nc,co->no", y[:, :, l], w2[:, :, k])
    if append:
        out = np.maximum(out, 0.0)
    return out


if __name__ == "__main__":
    configs = [
        dict(N=2, chin=16, chout=8, L=16, K=4, stride=2, append=True),
        dict(N=3, chin=12, chout=6, L=16, K=8, stride=2, append=False),  # padded channels, prime N
    ]
    key = jax.random.PRNGKey(0)
    for cfg in configs:
        key, k_x, k_w1, k_b1, k_w2, k_b2 = jax.random.split(key, 6)
        N, chin, chout, L = cfg["N"], cfg["chin"], cfg["chout"], cfg["L"]
        K, stride, append = cfg["K"], cfg["stride"], cfg["append"]

        x = jax.random.normal(k_x, (N, chin, L), jnp.float32)
        bound1 = 1.0 / np.sqrt(chin * 1)
        w1 = jax.random.uniform(k_w1, (chin, chin, 1), jnp.float32, -bound1, bound1)
        b1 = jax.random.uniform(k_b1, (chin,), jnp.float32, -bound1, bound1)
        bound2 = 1.0 / np.sqrt(chin * K)
        w2 = jax.random.uniform(k_w2, (chin, chout, K), jnp.float32, -bound2, bound2)
        b2 = jax.random.uniform(k_b2, (chout,), jnp.float32, -bound2, bound2)

        out = decoder_block(x, w1, b1, w2, b2, stride=stride, append=append)
        out = jax.block_until_ready(out)

        ref = ref_forward(x, w1, b1, w2, b2, stride=stride, append=append)
        np.testing.assert_allclose(np.asarray(out), ref, rtol=1e-4, atol=1e-4)

    print("KERNEL_OK")
</pallas_src>

<mosaic_0001>
module attributes {stable_mosaic.version = 11 : i64} {
  func.func @decoder_block_kernel(%arg0: i32, %arg1: memref<16x128xf32, #tpu.memory_space<vmem>>, %arg2: memref<1x128xf32, #tpu.memory_space<vmem>>, %arg3: memref<16x16xf32, #tpu.memory_space<vmem>>, %arg4: memref<16x1xf32, #tpu.memory_space<vmem>>, %arg5: memref<32x16xf32, #tpu.memory_space<vmem>>, %arg6: memref<8x1xf32, #tpu.memory_space<vmem>>, %arg7: memref<2x8x128xf32, #tpu.memory_space<vmem>>) attributes {dimension_semantics = [#tpu.dimension_semantics<parallel>], iteration_bounds = array<i64: 2>, scalar_prefetch = 0 : i64, scratch_operands = 0 : i64, tpu.core_type = #tpu.core_type<tc>, window_params = [{transform_indices = @transform_0, window_bounds = array<i64: 16, 128>}, {transform_indices = @transform_1, window_bounds = array<i64: 1, 128>}, {pipeline_mode = #tpu.pipeline_mode<synchronous>, transform_indices = @transform_2, window_bounds = array<i64: 16, 16>}, {pipeline_mode = #tpu.pipeline_mode<synchronous>, transform_indices = @transform_3, window_bounds = array<i64: 16, 1>}, {pipeline_mode = #tpu.pipeline_mode<synchronous>, transform_indices = @transform_4, window_bounds = array<i64: 32, 16>}, {pipeline_mode = #tpu.pipeline_mode<synchronous>, transform_indices = @transform_5, window_bounds = array<i64: 8, 1>}, {transform_indices = @transform_6, window_bounds = array<i64: 2, 8, 128>}]} {
    %c0 = arith.constant 0 : index
    %c0_0 = arith.constant 0 : index
    %0 = vector.load %arg3[%c0, %c0_0] : memref<16x16xf32, #tpu.memory_space<vmem>>, vector<16x16xf32>
    %c0_1 = arith.constant 0 : index
    %c0_2 = arith.constant 0 : index
    %1 = vector.load %arg1[%c0_1, %c0_2] : memref<16x128xf32, #tpu.memory_space<vmem>>, vector<16x128xf32>
    %cst = arith.constant dense<0.000000e+00> : vector<16x128xf32>
    %2 = tpu.matmul %0, %1, %cst {dimension_numbers = #tpu.dot_dimension_numbers<[1], [0], [0], [1], [0, 0, 1, 1], [], []>} : vector<16x16xf32>, vector<16x128xf32>, vector<16x128xf32> -> vector<16x128xf32>
    %c0_3 = arith.constant 0 : index
    %c0_4 = arith.constant 0 : index
    %3 = vector.load %arg4[%c0_3, %c0_4] : memref<16x1xf32, #tpu.memory_space<vmem>>, vector<16x1xf32>
    %4 = vector.broadcast %3 : vector<16x1xf32> to vector<16x128xf32>
    %5 = arith.addf %2, %4 : vector<16x128xf32>
    %cst_5 = arith.constant 0.000000e+00 : f32
    %6 = vector.broadcast %cst_5 : f32 to vector<16x128xf32>
    %7 = arith.maximumf %5, %6 : vector<16x128xf32>
    %c0_6 = arith.constant 0 : index
    %c0_7 = arith.constant 0 : index
    %8 = vector.load %arg2[%c0_6, %c0_7] : memref<1x128xf32, #tpu.memory_space<vmem>>, vector<1x128xf32>
    %9 = vector.broadcast %8 : vector<1x128xf32> to vector<16x128xf32>
    %10 = arith.mulf %7, %9 : vector<16x128xf32>
    %c0_8 = arith.constant 0 : index
    %c0_9 = arith.constant 0 : index
    %11 = vector.load %arg5[%c0_8, %c0_9] : memref<32x16xf32, #tpu.memory_space<vmem>>, vector<32x16xf32>
    %cst_10 = arith.constant dense<0.000000e+00> : vector<32x128xf32>
    %12 = tpu.matmul %11, %10, %cst_10 {dimension_numbers = #tpu.dot_dimension_numbers<[1], [0], [0], [1], [0, 0, 1, 1], [], []>} : vector<32x16xf32>, vector<16x128xf32>, vector<32x128xf32> -> vector<32x128xf32>
    %c0_11 = arith.constant 0 : index
    %c0_12 = arith.constant 0 : index
    %13 = vector.load %arg6[%c0_11, %c0_12] : memref<8x1xf32, #tpu.memory_space<vmem>>, vector<8x1xf32>
    %14 = vector.shape_cast %13 : vector<8x1xf32> to vector<8x1xf32>
    %15 = vector.broadcast %14 : vector<8x1xf32> to vector<8x128xf32>
    %16 = vector.extract_strided_slice %12 {offsets = [0, 0], sizes = [8, 128], strides = [1, 1]} : vector<32x128xf32> to vector<8x128xf32>
    %17 = arith.addf %15, %16 : vector<8x128xf32>
    %18 = vector.extract_strided_slice %12 {offsets = [16, 0], sizes = [8, 128], strides = [1, 1]} : vector<32x128xf32> to vector<8x128xf32>
    %c1_i32 = arith.constant 1 : i32
    %19 = tpu.dynamic_rotate %18 by %c1_i32 dim 1 : vector<8x128xf32>, i32 -> vector<8x128xf32>
    %20 = arith.addf %17, %19 : vector<8x128xf32>
    %cst_13 = arith.constant 0.000000e+00 : f32
    %21 = vector.broadcast %cst_13 : f32 to vector<8x128xf32>
    %22 = arith.maximumf %20, %21 : vector<8x128xf32>
    %c0_14 = arith.constant 0 : index
    %c0_15 = arith.constant 0 : index
    %c0_16 = arith.constant 0 : index
    %23 = vector.load %arg7[%c0_14, %c0_15, %c0_16] : memref<2x8x128xf32, #tpu.memory_space<vmem>>, vector<1x8x128xf32>
    %24 = vector.shape_cast %23 : vector<1x8x128xf32> to vector<8x128xf32>
    %25 = vector.shape_cast %22 : vector<8x128xf32> to vector<1x8x128xf32>
    tpu.vector_store %arg7[%c0_14, %c0_15, %c0_16], %25 {strides = array<i32>} : memref<2x8x128xf32, #tpu.memory_space<vmem>>, vector<1x8x128xf32>,
    %26 = vector.extract_strided_slice %12 {offsets = [8, 0], sizes = [8, 128], strides = [1, 1]} : vector<32x128xf32> to vector<8x128xf32>
    %27 = arith.addf %15, %26 : vector<8x128xf32>
    %28 = vector.extract_strided_slice %12 {offsets = [24, 0], sizes = [8, 128], strides = [1, 1]} : vector<32x128xf32> to vector<8x128xf32>
    %c1_i32_17 = arith.constant 1 : i32
    %29 = tpu.dynamic_rotate %28 by %c1_i32_17 dim 1 : vector<8x128xf32>, i32 -> vector<8x128xf32>
    %30 = arith.addf %27, %29 : vector<8x128xf32>
    %cst_18 = arith.constant 0.000000e+00 : f32
    %31 = vector.broadcast %cst_18 : f32 to vector<8x128xf32>
    %32 = arith.maximumf %30, %31 : vector<8x128xf32>
    %c1 = arith.constant 1 : index
    %c0_19 = arith.constant 0 : index
    %c0_20 = arith.constant 0 : index
    %33 = vector.load %arg7[%c1, %c0_19, %c0_20] : memref<2x8x128xf32, #tpu.memory_space<vmem>>, vector<1x8x128xf32>
    %34 = vector.shape_cast %33 : vector<1x8x128xf32> to vector<8x128xf32>
    %35 = vector.shape_cast %32 : vector<8x128xf32> to vector<1x8x128xf32>
    tpu.vector_store %arg7[%c1, %c0_19, %c0_20], %35 {strides = array<i32>} : memref<2x8x128xf32, #tpu.memory_space<vmem>>, vector<1x8x128xf32>,
    return
  }
  func.func @transform_0(%arg0: i32) -> (i32, i32) {
    %c0_i32 = arith.constant 0 : i32
    %c0_i32_0 = arith.constant 0 : i32
    return %c0_i32, %arg0 : i32, i32
  }
  func.func @transform_1(%arg0: i32) -> (i32, i32) {
    %c0_i32 = arith.constant 0 : i32
    %c0_i32_0 = arith.constant 0 : i32
    return %c0_i32, %arg0 : i32, i32
  }
  func.func @transform_2(%arg0: i32) -> (i32, i32) {
    %c0_i32 = arith.constant 0 : i32
    %c0_i32_0 = arith.constant 0 : i32
    %c0_i32_1 = arith.constant 0 : i32
    return %c0_i32, %c0_i32_0 : i32, i32
  }
  func.func @transform_3(%arg0: i32) -> (i32, i32) {
    %c0_i32 = arith.constant 0 : i32
    %c0_i32_0 = arith.constant 0 : i32
    %c0_i32_1 = arith.constant 0 : i32
    return %c0_i32, %c0_i32_0 : i32, i32
  }
  func.func @transform_4(%arg0: i32) -> (i32, i32) {
    %c0_i32 = arith.constant 0 : i32
    %c0_i32_0 = arith.constant 0 : i32
    %c0_i32_1 = arith.constant 0 : i32
    return %c0_i32, %c0_i32_0 : i32, i32
  }
  func.func @transform_5(%arg0: i32) -> (i32, i32) {
    %c0_i32 = arith.constant 0 : i32
    %c0_i32_0 = arith.constant 0 : i32
    %c0_i32_1 = arith.constant 0 : i32
    return %c0_i32, %c0_i32_0 : i32, i32
  }
  func.func @transform_6(%arg0: i32) -> (i32, i32, i32) {
    %c0_i32 = arith.constant 0 : i32
    %c0_i32_0 = arith.constant 0 : i32
    %c0_i32_1 = arith.constant 0 : i32
    return %c0_i32, %c0_i32_0, %arg0 : i32, i32, i32
  }
}

</mosaic_0001>

<llo_original>
// kernel: tpu_custom_call.1
$region0: #{tpu_custom_call.1}
  #allocation0 [shape = 'u32[]', space=smem, size = 0x4, offset = 0x4, fixed_abs, tag = 'smem constant byte address 0x4 - core index']
  #allocation1 [shape = 'u32[144,128]{1,0:T(1,128)}', space=vmem, size = 0x12000, scoped, tag = 'internal scratch']
  %s0 = inlined_call_operand.vmem [shape: f32[16,256], index: 0, kind: input, shape index: {}]
  %s1 = inlined_call_operand.vmem [shape: f32[1,256], index: 1, kind: input, shape index: {}]
  %s2 = inlined_call_operand.vmem [shape: f32[16,16], index: 2, kind: input, shape index: {}]
  %s3 = inlined_call_operand.vmem [shape: f32[16,1], index: 3, kind: input, shape index: {}]
  %s4 = inlined_call_operand.vmem [shape: f32[32,16], index: 4, kind: input, shape index: {}]
  %s5 = inlined_call_operand.vmem [shape: f32[8,1], index: 5, kind: input, shape index: {}]
  %s6 = inlined_call_operand.hbm [shape: f32[2,8,256], index: 6, kind: output, shape index: {}]
  %s7 = sld [smem:[#allocation0]]
  $region95: #{tpu_custom_call.1} parent=0
    _
  %s9 = ssub.s32 1, %s7
  %s10 = scalar_select 0, %s9, %s7
  $region1: #{tpu_custom_call.1} parent=0
    #allocation2 [shape = 'u8[16384]{0}', space=vmem, size = 0x4000, scoped, tag = 'input window, operand 0']
    #allocation3 [shape = 'u8[16384]{0}', space=vmem, size = 0x4000, scoped, tag = 'output window, operand 0']
    #allocation4 [shape = 's32[2]{0}', space=sflag, size = 0x8, scoped, tag = 'scoped memory for tpu_custom_call.1']
    %11 = vsyncpa [#allocation4], 0
    %s12 = scalar_lea.sflag [#allocation4], 1
    %13 = vsyncpa %s12, 0
    loop: start=0, step=1, limit=4
    $region2: #{tpu_custom_call.1} parent=1 // loop_pre_header
      _
    $region3: #{tpu_custom_call.1} parent=1 // loop_header
      %s15 = sphi 0, %s19
      %p16 = scmp.ge.s32.totalorder %s15, 4
      %s25 = sphi 0, %s27
      %s28 = sphi 0, %s25
      %s29 = sphi 0, %s28
      %s45 = sphi 0, %s29
      %s51 = sphi 0, %s53
      %s54 = sphi 0, %s51
      %s55 = sphi 0, %s54
      %s71 = sphi 0, %s55
      %s75 = sphi 0, %s75
      %s77 = sphi 0, %s75
      %s78 = sphi 0, %s77
      %s92 = sphi 0, %s78
      %s96 = sphi 0, %s96
      %s98 = sphi 0, %s96
      %s99 = sphi 0, %s98
      %s113 = sphi 0, %s99
      %s117 = sphi 0, %s117
      %s119 = sphi 0, %s117
      %s120 = sphi 0, %s119
      %s134 = sphi 0, %s120
      %s138 = sphi 0, %s138
      %s140 = sphi 0, %s138
      %s141 = sphi 0, %s140
      %s155 = sphi 0, %s141
      %s161 = sphi 0, %s163
      %s164 = sphi 0, %s161
      %s165 = sphi 0, %s164
      %s181 = sphi 0, %s165
    $region4: #{tpu_custom_call.1} parent=1 // loop_header_branch
      %18 = sbr.rel (%p16) target = $region8
    $region5: #{tpu_custom_call.1} parent=1 // loop_body
      %s20 = ssub.s32 %s15, 1
      %s21 = ssub.s32 %s15, 2
      %s22 = sadd.s32 %s15, 1
      %s23 = ssub.s32 %s15, %s22
      %p24 = scmp.eq.s32.totalorder %s23, 0
      %s26 = sadd.s32 %s25, 1
      %s27 = scalar_select %p24, %s25, %s26
      %p30 = pneg %p24
      %p31 = scmp.eq.s32.totalorder %s15, 1
      %p32 = por %p30, %p31
      %p33 = scmp.ne.s32.totalorder %s25, %s28
      %p34 = scmp.eq.s32.totalorder %s15, 0
      %p35 = por %p33, %p34
      %p36 = scmp.ne.s32.totalorder %s25, %s28
      %p37 = scmp.eq.s32.totalorder %s20, 1
      %p38 = por %p36, %p37
      %p39 = scmp.ne.s32.totalorder %s28, %s29
      %p40 = scmp.eq.s32.totalorder %s20, 0
      %p41 = por %p39, %p40
      %p42 = scmp.ne.s32.totalorder %s28, %s29
      %p43 = scmp.eq.s32.totalorder %s21, 1
      %p44 = por %p42, %p43
      %p46 = scmp.ne.s32.totalorder %s29, %s45
      %p47 = scmp.eq.s32.totalorder %s21, 0
      %p48 = por %p46, %p47
      %s49 = ssub.s32 %s15, %s22
      %p50 = scmp.eq.s32.totalorder %s49, 0
      %s52 = sadd.s32 %s51, 1
      %s53 = scalar_select %p50, %s51, %s52
      %p56 = pneg %p50
      %p57 = scmp.eq.s32.totalorder %s15, 1
      %p58 = por %p56, %p57
      %p59 = scmp.ne.s32.totalorder %s51, %s54
      %p60 = scmp.eq.s32.totalorder %s15, 0
      %p61 = por %p59, %p60
      %p62 = scmp.ne.s32.totalorder %s51, %s54
      %p63 = scmp.eq.s32.totalorder %s20, 1
      %p64 = por %p62, %p63
      %p65 = scmp.ne.s32.totalorder %s54, %s55
      %p66 = scmp.eq.s32.totalorder %s20, 0
      %p67 = por %p65, %p66
      %p68 = scmp.ne.s32.totalorder %s54, %s55
      %p69 = scmp.eq.s32.totalorder %s21, 1
      %p70 = por %p68, %p69
      %p72 = scmp.ne.s32.totalorder %s55, %s71
      %p73 = scmp.eq.s32.totalorder %s21, 0
      %p74 = por %p72, %p73
      %s76 = sadd.s32 %s75, 1
      %p79 = scmp.eq.s32.totalorder %s15, 1
      %p80 = scmp.ne.s32.totalorder %s75, %s77
      %p81 = scmp.eq.s32.totalorder %s15, 0
      %p82 = por %p80, %p81
      %p83 = scmp.ne.s32.totalorder %s75, %s77
      %p84 = scmp.eq.s32.totalorder %s20, 1
      %p85 = por %p83, %p84
      %p86 = scmp.ne.s32.totalorder %s77, %s78
      %p87 = scmp.eq.s32.totalorder %s20, 0
      %p88 = por %p86, %p87
      %p89 = scmp.ne.s32.totalorder %s77, %s78
      %p90 = scmp.eq.s32.totalorder %s21, 1
      %p91 = por %p89, %p90
      %p93 = scmp.ne.s32.totalorder %s78, %s92
      %p94 = scmp.eq.s32.totalorder %s21, 0
      %p95 = por %p93, %p94
      %s97 = sadd.s32 %s96, 1
      %p100 = scmp.eq.s32.totalorder %s15, 1
      %p101 = scmp.ne.s32.totalorder %s96, %s98
      %p102 = scmp.eq.s32.totalorder %s15, 0
      %p103 = por %p101, %p102
      %p104 = scmp.ne.s32.totalorder %s96, %s98
      %p105 = scmp.eq.s32.totalorder %s20, 1
      %p106 = por %p104, %p105
      %p107 = scmp.ne.s32.totalorder %s98, %s99
      %p108 = scmp.eq.s32.totalorder %s20, 0
      %p109 = por %p107, %p108
      %p110 = scmp.ne.s32.totalorder %s98, %s99
      %p111 = scmp.eq.s32.totalorder %s21, 1
      %p112 = por %p110, %p111
      %p114 = scmp.ne.s32.totalorder %s99, %s113
      %p115 = scmp.eq.s32.totalorder %s21, 0
      %p116 = por %p114, %p115
      %s118 = sadd.s32 %s117, 1
      %p121 = scmp.eq.s32.totalorder %s15, 1
      %p122 = scmp.ne.s32.totalorder %s117, %s119
      %p123 = scmp.eq.s32.totalorder %s15, 0
      %p124 = por %p122, %p123
      %p125 = scmp.ne.s32.totalorder %s117, %s119
      %p126 = scmp.eq.s32.totalorder %s20, 1
      %p127 = por %p125, %p126
      %p128 = scmp.ne.s32.totalorder %s119, %s120
      %p129 = scmp.eq.s32.totalorder %s20, 0
      %p130 = por %p128, %p129
      %p131 = scmp.ne.s32.totalorder %s119, %s120
      %p132 = scmp.eq.s32.totalorder %s21, 1
      %p133 = por %p131, %p132
      %p135 = scmp.ne.s32.totalorder %s120, %s134
      %p136 = scmp.eq.s32.totalorder %s21, 0
      %p137 = por %p135, %p136
      %s139 = sadd.s32 %s138, 1
      %p142 = scmp.eq.s32.totalorder %s15, 1
      %p143 = scmp.ne.s32.totalorder %s138, %s140
      %p144 = scmp.eq.s32.totalorder %s15, 0
      %p145 = por %p143, %p144
      %p146 = scmp.ne.s32.totalorder %s138, %s140
      %p147 = scmp.eq.s32.totalorder %s20, 1
      %p148 = por %p146, %p147
      %p149 = scmp.ne.s32.totalorder %s140, %s141
      %p150 = scmp.eq.s32.totalorder %s20, 0
      %p151 = por %p149, %p150
      %p152 = scmp.ne.s32.totalorder %s140, %s141
      %p153 = scmp.eq.s32.totalorder %s21, 1
      %p154 = por %p152, %p153
      %p156 = scmp.ne.s32.totalorder %s141, %s155
      %p157 = scmp.eq.s32.totalorder %s21, 0
      %p158 = por %p156, %p157
      %s159 = ssub.s32 %s15, %s22
      %p160 = scmp.eq.s32.totalorder %s159, 0
      %s162 = sadd.s32 %s161, 1
      %s163 = scalar_select %p160, %s161, %s162
      %p166 = pneg %p160
      %p167 = scmp.eq.s32.totalorder %s15, 1
      %p168 = por %p166, %p167
      %p169 = scmp.ne.s32.totalorder %s161, %s164
      %p170 = scmp.eq.s32.totalorder %s15, 0
      %p171 = por %p169, %p170
      %p172 = scmp.ne.s32.totalorder %s161, %s164
      %p173 = scmp.eq.s32.totalorder %s20, 1
      %p174 = por %p172, %p173
      %p175 = scmp.ne.s32.totalorder %s164, %s165
      %p176 = scmp.eq.s32.totalorder %s20, 0
      %p177 = por %p175, %p176
      %p178 = scmp.ne.s32.totalorder %s164, %s165
      %p179 = scmp.eq.s32.totalorder %s21, 1
      %p180 = por %p178, %p179
      %p182 = scmp.ne.s32.totalorder %s165, %s181
      %p183 = scmp.eq.s32.totalorder %s21, 0
      %p184 = por %p182, %p183
      %p185 = scmp.le.s32.totalorder 1, %s15
      %p186 = scmp.lt.s32.totalorder %s15, 3
      %p187 = pnand %p185, %p186
      %p188 = pneg %p187
      // Predicated region
      $region9: #{tpu_custom_call.1} parent=5 // pred_check
        _
      $region10: #{tpu_custom_call.1} parent=5 // pred_check_branch
        %190 = sbr.rel (%p187) target = $region12
      $region11: #{tpu_custom_call.1} parent=5 // pred_region
        %s191 = ssub.s32 %s15, 1
        // Predicated region
        $region13: #{tpu_custom_call.1} parent=11 // pred_check
          %p192 = pneg %p88
        $region14: #{tpu_custom_call.1} parent=11 // pred_check_branch
          %194 = sbr.rel (%p192) target = $region16
        $region15: #{tpu_custom_call.1} parent=11 // pred_region
          _
        $region16: #{tpu_custom_call.1} parent=11 // pred_fallthru
          _
        // Predicated region
        $region17: #{tpu_custom_call.1} parent=11 // pred_check
          %p195 = pneg %p109
        $region18: #{tpu_custom_call.1} parent=11 // pred_check_branch
          %197 = sbr.rel (%p195) target = $region20
        $region19: #{tpu_custom_call.1} parent=11 // pred_region
          _
        $region20: #{tpu_custom_call.1} parent=11 // pred_fallthru
          _
        // Predicated region
        $region21: #{tpu_custom_call.1} parent=11 // pred_check
          %p198 = pneg %p130
        $region22: #{tpu_custom_call.1} parent=11 // pred_check_branch
          %200 = sbr.rel (%p198) target = $region24
        $region23: #{tpu_custom_call.1} parent=11 // pred_region
          _
        $region24: #{tpu_custom_call.1} parent=11 // pred_fallthru
          _
        // Predicated region
        $region25: #{tpu_custom_call.1} parent=11 // pred_check
          %p201 = pneg %p151
        $region26: #{tpu_custom_call.1} parent=11 // pred_check_branch
          %203 = sbr.rel (%p201) target = $region28
        $region27: #{tpu_custom_call.1} parent=11 // pred_region
          _
        $region28: #{tpu_custom_call.1} parent=11 // pred_fallthru
          _
      $region12: #{tpu_custom_call.1} parent=5 // pred_fallthru
        _
      %p204 = scmp.lt.s32.totalorder %s15, 2
      // Predicated region
      $region29: #{tpu_custom_call.1} parent=5 // pred_check
        %p205 = pneg %p204
      $region30: #{tpu_custom_call.1} parent=5 // pred_check_branch
        %207 = sbr.rel (%p205) target = $region32
      $region31: #{tpu_custom_call.1} parent=5 // pred_region
        // Predicated region
        $region33: #{tpu_custom_call.1} parent=31 // pred_check
          %p208 = pneg %p35
        $region34: #{tpu_custom_call.1} parent=31 // pred_check_branch
          %210 = sbr.rel (%p208) target = $region36
        $region35: #{tpu_custom_call.1} parent=31 // pred_region
          %s211 = sand.u32 %s25, 1
          %s212 = sand.u32 %s25, 1
          %s213 = smul.addr %s212, 16
          %s214 = scalar_lea.vmem [#allocation2], %s213
          %s215 = smul.addr %s15, 8
          %s216 = scalar_lea.vmem %s0, %s215
          // Predicated region
          $region37: #{tpu_custom_call.1} parent=35 // pred_check
            _
          $region38: #{tpu_custom_call.1} parent=35 // pred_check_branch
            %218 = sbr.rel (0) target = $region40
          $region39: #{tpu_custom_call.1} parent=35 // pred_region
            // Predicated region
            $region41: #{tpu_custom_call.1} parent=39 // pred_check
              _
            $region42: #{tpu_custom_call.1} parent=39 // pred_check_branch
              %220 = sbr.rel (0) target = $region44
            $region43: #{tpu_custom_call.1} parent=39 // pred_region
              // Predicated region
              $region56: #{tpu_custom_call.1} parent=43 // pred_check
                _
              $region57: #{tpu_custom_call.1} parent=43 // pred_check_branch
                %237 = sbr.rel (0) target = $region59
              $region58: #{tpu_custom_call.1} parent=43 // pred_region
                loop: start=0, step=1, limit=1
                $region60: #{tpu_custom_call.1} parent=58 // loop_pre_header
                  _
                $region61: #{tpu_custom_call.1} parent=58 // loop_header
                  %s239 = sphi 0, %s243
                  %p240 = scmp.ge.s32.totalorder %s239, 1
                  %s244 = sphi %s216, %s216
                  %s245 = sphi %s214, %s214
                $region62: #{tpu_custom_call.1} parent=58 // loop_header_branch
                  %242 = sbr.rel (%p240) target = $region66
                $region63: #{tpu_custom_call.1} parent=58 // loop_body
                  %v246 = vld [vmem:[%s244] sm:$0xff]
                  %247 = vst [vmem:[%s245] sm:$0xff] %v246
                  %v248 = vld [vmem:[%s244 + $0x10] sm:$0xff]
                  %249 = vst [vmem:[%s245 + $0x8] sm:$0xff] %v248
                $region64: #{tpu_custom_call.1} parent=58 // loop_footer
                  %s243 = sadd.s32 1, %s239
                $region65: #{tpu_custom_call.1} parent=58 // loop_footer_branch
                  %238 = sbr.rel target = $region61
                $region66: #{tpu_custom_call.1} parent=58 // loop_exit
                  _
              $region59: #{tpu_custom_call.1} parent=43 // pred_fallthru
                _
              // Predicated region
              $region67: #{tpu_custom_call.1} parent=43 // pred_check
                _
              $region68: #{tpu_custom_call.1} parent=43 // pred_check_branch
                %251 = sbr.rel target = $region70
              $region69: #{tpu_custom_call.1} parent=43 // pred_region
                _
              $region70: #{tpu_custom_call.1} parent=43 // pred_fallthru
                _
            $region44: #{tpu_custom_call.1} parent=39 // pred_fallthru
              _
            // Predicated region
            $region45: #{tpu_custom_call.1} parent=39 // pred_check
              _
            $region46: #{tpu_custom_call.1} parent=39 // pred_check_branch
              %222 = sbr.rel target = $region48
            $region47: #{tpu_custom_call.1} parent=39 // pred_region
              loop: start=0, step=1, limit=1
              $region49: #{tpu_custom_call.1} parent=47 // loop_pre_header
                _
              $region50: #{tpu_custom_call.1} parent=47 // loop_header
                %s225 = sphi 0, %s229
                %p226 = scmp.ge.s32.totalorder %s225, 1
                %s230 = sphi %s216, %s216
                %s231 = sphi %s214, %s214
              $region51: #{tpu_custom_call.1} parent=47 // loop_header_branch
                %228 = sbr.rel (%p226) target = $region55
              $region52: #{tpu_custom_call.1} parent=47 // loop_body
                %v232 = vld [vmem:[%s230] sm:$0xff]
                %233 = vst [vmem:[%s231] sm:$0xff] %v232
                %v234 = vld [vmem:[%s230 + $0x10] sm:$0xff]
                %235 = vst [vmem:[%s231 + $0x8] sm:$0xff] %v234
              $region53: #{tpu_custom_call.1} parent=47 // loop_footer
                %s229 = sadd.s32 1, %s225
              $region54: #{tpu_custom_call.1} parent=47 // loop_footer_branch
                %224 = sbr.rel target = $region50
              $region55: #{tpu_custom_call.1} parent=47 // loop_exit
                _
            $region48: #{tpu_custom_call.1} parent=39 // pred_fallthru
              _
          $region40: #{tpu_custom_call.1} parent=35 // pred_fallthru
            _
          %252 = vnop
        $region36: #{tpu_custom_call.1} parent=31 // pred_fallthru
          _
        // Predicated region
        $region71: #{tpu_custom_call.1} parent=31 // pred_check
          %p253 = pneg %p61
        $region72: #{tpu_custom_call.1} parent=31 // pred_check_branch
          %255 = sbr.rel (%p253) target = $region74
        $region73: #{tpu_custom_call.1} parent=31 // pred_region
          %p256 = scmp.lt.s32.totalorder %s15, 1
          %s257 = scalar_select %p256, %s15, 1
          %s258 = scalar_lea.vmem %s1, %s257
        $region74: #{tpu_custom_call.1} parent=31 // pred_fallthru
          _
      $region32: #{tpu_custom_call.1} parent=5 // pred_fallthru
        _
      %p259 = scmp.le.s32.totalorder 1, %s15
      %p260 = scmp.lt.s32.totalorder %s15, 3
      %p261 = pnand %p259, %p260
      %p262 = pneg %p261
      // Predicated region
      $region75: #{tpu_custom_call.1} parent=5 // pred_check
        _
      $region76: #{tpu_custom_call.1} parent=5 // pred_check_branch
        %264 = sbr.rel (%p261) target = $region78
      $region77: #{tpu_custom_call.1} parent=5 // pred_region
        %s265 = ssub.s32 %s15, 1
        %s266 = sand.u32 %s28, 1
        %s267 = sand.u32 %s28, 1
        %s268 = smul.addr %s267, 16
        %s269 = scalar_lea.vmem [#allocation2], %s268
        // Predicated region
        $region79: #{tpu_custom_call.1} parent=77 // pred_check
          %p270 = pneg %p41
        $region80: #{tpu_custom_call.1} parent=77 // pred_check_branch
          %272 = sbr.rel (%p270) target = $region82
        $region81: #{tpu_custom_call.1} parent=77 // pred_region
          _
        $region82: #{tpu_custom_call.1} parent=77 // pred_fallthru
          _
        %s273 = sand.u32 %s28, 1
        %s274 = sand.u32 %s28, 1
        %s275 = smul.addr %s274, 16
        %s276 = scalar_lea.vmem [#allocation2], %s275
        %p277 = pneg %p41
        %p278 = pneg %p38
        %p279 = scmp.lt.s32.totalorder %s20, 1
        %s280 = scalar_select %p279, %s20, 1
        %s281 = scalar_lea.vmem %s1, %s280
        %p282 = pneg %p67
        %p283 = pneg %p64
        %p284 = pneg %p88
        %p285 = pneg %p85
        %p286 = pneg %p109
        %p287 = pneg %p106
        %p288 = pneg %p130
        %p289 = pneg %p127
        %p290 = pneg %p151
        %p291 = pneg %p148
        %p292 = pneg %p177
        %p293 = pneg %p174
        %s294 = sand.u32 %s164, 1
        %s295 = scalar_lea.sflag [#allocation4], %s294
        %s296 = sand.u32 %s164, 1
        %s297 = smul.addr %s296, 16
        %s298 = scalar_lea.vmem [#allocation3], %s297
        %p299 = scmp.lt.s32.totalorder %s20, 1
        %s300 = scalar_select %p299, %s20, 1
        %s301 = scalar_lea.vmem %s1, %s300
        %v302 = vld [vmem:[%s2] sm:$0xff]
        %v303 = vld [vmem:[%s2 + $0x8] sm:$0xff]
        %v304 = vld [vmem:[%s269] sm:$0xff]
        %v305 = vld [vmem:[%s269 + $0x8] sm:$0xff]
        %v306 = vld [vmem:[%s3] sm:$0xff]
        %v307 = vld [vmem:[%s3 + $0x8] sm:$0xff]
        %309 = vset.pattern.permute.xlu0 0
        %310 = vperm.xlu0 %309, %v306
        %v311 = vpop.permute.xlu0 %310
        %314 = vset.pattern.permute.xlu0 0
        %315 = vperm.xlu0 %314, %v307
        %v316 = vpop.permute.xlu0 %315
        %vm318 = vcmask 130048
        %v320 = vsel %vm318, %v302, 0
        %v323 = vsel %vm318, %v303, 0
        %325 = vmatprep.subr.mxu0 0.0
        %326 = vmatpush1.msra.mxu0 %v304
        %327 = vmatprep.subr.mxu0 0.0
        %328 = vmatpush1.msra.mxu0 %v305
        %329 = vmatprep.subr.mxu0 0.0
        %330 = vmatpush1.msra.mxu0 0.0
        %331 = vmatprep.subr.mxu0 0.0
        %332 = vmatpush1.msra.mxu0 0.0
        %333 = vmatprep.subr.mxu0 0.0
        %334 = vmatpush1.msra.mxu0 0.0
        %335 = vmatprep.subr.mxu0 0.0
        %336 = vmatpush1.msra.mxu0 0.0
        %337 = vmatprep.subr.mxu0 0.0
        %338 = vmatpush1.msra.mxu0 0.0
        %339 = vmatprep.subr.mxu0 0.0
        %340 = vmatpush1.msra.mxu0 0.0
        %341 = vmatprep.subr.mxu0 0.0
        %342 = vmatpush1.msra.mxu0 0.0
        %343 = vmatprep.subr.mxu0 0.0
        %344 = vmatpush1.msra.mxu0 0.0
        %345 = vmatprep.subr.mxu0 0.0
        %346 = vmatpush1.msra.mxu0 0.0
        %347 = vmatprep.subr.mxu0 0.0
        %348 = vmatpush1.msra.mxu0 0.0
        %349 = vmatprep.subr.mxu0 0.0
        %350 = vmatpush1.msra.mxu0 0.0
        %351 = vmatprep.subr.mxu0 0.0
        %352 = vmatpush1.msra.mxu0 0.0
        %353 = vmatprep.subr.mxu0 0.0
        %354 = vmatpush1.msra.mxu0 0.0
        %355 = vmatprep.subr.mxu0 0.0
        %356 = vmatpush1.msra.mxu0 0.0
        %357 = vmatprep.subr.mxu0 0.0
        %358 = vmatpush1.msra.mxu0 0.0
        %359 = vmatprep.subr.mxu0 0.0
        %360 = vmatpush1.msra.mxu0 0.0
        %361 = vmatprep.subr.mxu0 0.0
        %362 = vmatpush1.msra.mxu0 0.0
        %363 = vmatprep.subr.mxu0 0.0
        %364 = vmatpush1.msra.mxu0 0.0
        %365 = vmatprep.subr.mxu0 0.0
        %366 = vmatpush1.msra.mxu0 0.0
        %367 = vmatprep.subr.mxu0 0.0
        %368 = vmatpush1.msra.mxu0 0.0
        %369 = vmatprep.subr.mxu0 0.0
        %370 = vmatpush1.msra.mxu0 0.0
        %371 = vmatprep.subr.mxu0 0.0
        %372 = vmatpush1.msra.mxu0 0.0
        %373 = vmatprep.subr.mxu0 0.0
        %374 = vmatpush1.msra.mxu0 0.0
        %375 = vmatprep.subr.mxu0 0.0
        %376 = vmatpush1.msra.mxu0 0.0
        %377 = vmatprep.subr.mxu0 0.0
        %378 = vmatpush1.msra.mxu0 0.0
        %379 = vmatprep.subr.mxu0 0.0
        %380 = vmatpush1.msra.mxu0 0.0
        %381 = vmatprep.subr.mxu0 0.0
        %382 = vmatpush1.msra.mxu0 0.0
        %383 = vmatprep.subr.mxu0 0.0
        %384 = vmatpush1.msra.mxu0 0.0
        %385 = vmatprep.subr.mxu0 0.0
        %386 = vmatpush1.msra.mxu0 0.0
        %387 = vmatprep.subr.mxu0 0.0
        %388 = vmatpush1.msra.mxu0 0.0
        %389 = vmatprep.mubr.f32.mxu0 0.0
        %390 = vmatmul.mubr.f32.gmra.mrb[0].mxu0 %v320
        %v391 = vpop.f32.mrb[0].mxu0
        %v392 = vadd.f32 %v311, %v391
        %v393 = vpop.f32.mrb[0].mxu0
        %394 = vmatprep.mubr.f32.mxu0 0.0
        %395 = vmatmul.mubr.f32.gmra.mrb[0].mxu0 %v323
        %v396 = vpop.f32.mrb[0].mxu0
        %v397 = vadd.f32 %v316, %v396
        %v398 = vpop.f32.mrb[0].mxu0
        %399 = vdwg.mxu0
        %v400 = vmax.f32 %v392, 0.0
        %v401 = vmax.f32 %v397, 0.0
        %v402 = vld [vmem:[%s301] sm:$0x1]
        %v404 = vlaneseq
        %v405 = vshrl.u32 %v404, 7
        %v406 = vsub.s32 0, %v405
        %v407 = vrot.slane %v402, %v406
        %v409 = vmul.f32 %v400, %v407
        %v410 = vmul.f32 %v401, %v407
        %v411 = vld [vmem:[%s4] sm:$0xff]
        %v412 = vld [vmem:[%s4 + $0x8] sm:$0xff]
        %v413 = vld [vmem:[%s4 + $0x10] sm:$0xff]
        %v414 = vld [vmem:[%s4 + $0x18] sm:$0xff]
        %v416 = vsel %vm318, %v411, 0
        %v419 = vsel %vm318, %v412, 0
        %v422 = vsel %vm318, %v413, 0
        %v425 = vsel %vm318, %v414, 0
        %427 = vmatprep.subr.mxu0 0.0
        %428 = vmatpush1.msra.mxu0 %v409
        %429 = vmatprep.subr.mxu0 0.0
        %430 = vmatpush1.msra.mxu0 %v410
        %431 = vmatprep.subr.mxu0 0.0
        %432 = vmatpush1.msra.mxu0 0.0
        %433 = vmatprep.subr.mxu0 0.0
        %434 = vmatpush1.msra.mxu0 0.0
        %435 = vmatprep.subr.mxu0 0.0
        %436 = vmatpush1.msra.mxu0 0.0
        %437 = vmatprep.subr.mxu0 0.0
        %438 = vmatpush1.msra.mxu0 0.0
        %439 = vmatprep.subr.mxu0 0.0
        %440 = vmatpush1.msra.mxu0 0.0
        %441 = vmatprep.subr.mxu0 0.0
        %442 = vmatpush1.msra.mxu0 0.0
        %443 = vmatprep.subr.mxu0 0.0
        %444 = vmatpush1.msra.mxu0 0.0
        %445 = vmatprep.subr.mxu0 0.0
        %446 = vmatpush1.msra.mxu0 0.0
        %447 = vmatprep.subr.mxu0 0.0
        %448 = vmatpush1.msra.mxu0 0.0
        %449 = vmatprep.subr.mxu0 0.0
        %450 = vmatpush1.msra.mxu0 0.0
        %451 = vmatprep.subr.mxu0 0.0
        %452 = vmatpush1.msra.mxu0 0.0
        %453 = vmatprep.subr.mxu0 0.0
        %454 = vmatpush1.msra.mxu0 0.0
        %455 = vmatprep.subr.mxu0 0.0
        %456 = vmatpush1.msra.mxu0 0.0
        %457 = vmatprep.subr.mxu0 0.0
        %458 = vmatpush1.msra.mxu0 0.0
        %459 = vmatprep.subr.mxu0 0.0
        %460 = vmatpush1.msra.mxu0 0.0
        %461 = vmatprep.subr.mxu0 0.0
        %462 = vmatpush1.msra.mxu0 0.0
        %463 = vmatprep.subr.mxu0 0.0
        %464 = vmatpush1.msra.mxu0 0.0
        %465 = vmatprep.subr.mxu0 0.0
        %466 = vmatpush1.msra.mxu0 0.0
        %467 = vmatprep.subr.mxu0 0.0
        %468 = vmatpush1.msra.mxu0 0.0
        %469 = vmatprep.subr.mxu0 0.0
        %470 = vmatpush1.msra.mxu0 0.0
        %471 = vmatprep.subr.mxu0 0.0
        %472 = vmatpush1.msra.mxu0 0.0
        %473 = vmatprep.subr.mxu0 0.0
        %474 = vmatpush1.msra.mxu0 0.0
        %475 = vmatprep.subr.mxu0 0.0
        %476 = vmatpush1.msra.mxu0 0.0
        %477 = vmatprep.subr.mxu0 0.0
        %478 = vmatpush1.msra.mxu0 0.0
        %479 = vmatprep.subr.mxu0 0.0
        %480 = vmatpush1.msra.mxu0 0.0
        %481 = vmatprep.subr.mxu0 0.0
        %482 = vmatpush1.msra.mxu0 0.0
        %483 = vmatprep.subr.mxu0 0.0
        %484 = vmatpush1.msra.mxu0 0.0
        %485 = vmatprep.subr.mxu0 0.0
        %486 = vmatpush1.msra.mxu0 0.0
        %487 = vmatprep.subr.mxu0 0.0
        %488 = vmatpush1.msra.mxu0 0.0
        %489 = vmatprep.subr.mxu0 0.0
        %490 = vmatpush1.msra.mxu0 0.0
        %491 = vmatprep.mubr.f32.mxu0 0.0
        %492 = vmatmul.mubr.f32.gmra.mrb[0].mxu0 %v416
        %v493 = vpop.f32.mrb[0].mxu0
        %v494 = vadd.f32 0.0, %v493
        %v495 = vpop.f32.mrb[0].mxu0
        %496 = vmatprep.mubr.f32.mxu0 0.0
        %497 = vmatmul.mubr.f32.gmra.mrb[0].mxu0 %v419
        %v498 = vpop.f32.mrb[0].mxu0
        %v499 = vadd.f32 0.0, %v498
        %v500 = vpop.f32.mrb[0].mxu0
        %501 = vmatprep.mubr.f32.mxu0 0.0
        %502 = vmatmul.mubr.f32.gmra.mrb[0].mxu0 %v422
        %v503 = vpop.f32.mrb[0].mxu0
        %v504 = vadd.f32 0.0, %v503
        %v505 = vpop.f32.mrb[0].mxu0
        %506 = vmatprep.mubr.f32.mxu0 0.0
        %507 = vmatmul.mubr.f32.gmra.mrb[0].mxu0 %v425
        %v508 = vpop.f32.mrb[0].mxu0
        %v509 = vadd.f32 0.0, %v508
        %v510 = vpop.f32.mrb[0].mxu0
        %511 = vdwg.mxu0
        %v512 = vld [vmem:[%s5] sm:$0xff]
        %514 = vset.pattern.permute.xlu0 0
        %515 = vperm.xlu0 %514, %v512
        %v516 = vpop.permute.xlu0 %515
        %v518 = vadd.f32 %v516, %v494
        %519 = vrot.lane.b32.xlu0 %v504, 1
        %v520 = vpop.permute.xlu0 %519
        %v521 = vadd.f32 %v518, %v520
        %v522 = vmax.f32 %v521, 0.0
        %523 = vst [vmem:[%s298] sm:$0xff] %v522
        %v524 = vadd.f32 %v516, %v499
        %525 = vrot.lane.b32.xlu0 %v509, 1
        %v526 = vpop.permute.xlu0 %525
        %v527 = vadd.f32 %v524, %v526
        %v528 = vmax.f32 %v527, 0.0
        %s529 = scalar_lea.vmem %s298, 8 [#allocation3]
        %530 = vst [vmem:[%s529] sm:$0xff] %v528
        %s531 = sand.u32 %s164, 1
        %s532 = scalar_lea.sflag [#allocation4], %s531
        %s533 = sand.u32 %s164, 1
        %s534 = smul.addr %s533, 16
        %s535 = scalar_lea.vmem [#allocation3], %s534
        // Predicated region
        $region83: #{tpu_custom_call.1} parent=77 // pred_check
          %p536 = pneg %p174
        $region84: #{tpu_custom_call.1} parent=77 // pred_check_branch
          %538 = sbr.rel (%p536) target = $region86
        $region85: #{tpu_custom_call.1} parent=77 // pred_region
          %s540 = ssub.s32 256, 256
          %541 = vsyncadd %s532, %s540
          %s542 = smul.addr %s20, 128
          %s543 = scalar_lea.hbm %s6, %s542
          %s544 = sshll.u32 %s535, 4
          %s545 = int_to_ptr.vmem [resolvable:$true] %s544
          %550 = dma.vmem_to_hbm [thread:$0]  %s545, 256, %s543, %s532, 128, 256, 8
        $region86: #{tpu_custom_call.1} parent=77 // pred_fallthru
          _
      $region78: #{tpu_custom_call.1} parent=5 // pred_fallthru
        _
      %p551 = scmp.le.s32.totalorder 2, %s15
      // Predicated region
      $region87: #{tpu_custom_call.1} parent=5 // pred_check
        %p552 = pneg %p551
      $region88: #{tpu_custom_call.1} parent=5 // pred_check_branch
        %554 = sbr.rel (%p552) target = $region90
      $region89: #{tpu_custom_call.1} parent=5 // pred_region
        %s555 = ssub.s32 %s15, 2
        // Predicated region
        $region91: #{tpu_custom_call.1} parent=89 // pred_check
          %p556 = pneg %p180
        $region92: #{tpu_custom_call.1} parent=89 // pred_check_branch
          %558 = sbr.rel (%p556) target = $region94
        $region93: #{tpu_custom_call.1} parent=89 // pred_region
          %s559 = sand.u32 %s165, 1
          %s560 = scalar_lea.sflag [#allocation4], %s559
          %s561 = sand.u32 %s165, 1
          %s562 = smul.addr %s561, 16
          %s563 = scalar_lea.vmem [#allocation3], %s562
          %564 = dma.done %s560, 256
        $region94: #{tpu_custom_call.1} parent=89 // pred_fallthru
          _
      $region90: #{tpu_custom_call.1} parent=5 // pred_fallthru
        _
    $region6: #{tpu_custom_call.1} parent=1 // loop_footer
      %s19 = sadd.s32 1, %s15
    $region7: #{tpu_custom_call.1} parent=1 // loop_footer_branch
      %14 = sbr.rel target = $region3
    $region8: #{tpu_custom_call.1} parent=1 // loop_exit
      _
    %565 = vsyncpa [#allocation4], 1
    %s566 = scalar_lea.sflag [#allocation4], 1
    %567 = vsyncpa %s566, 1

</llo_original>
